<compile_context>
chip_gen: v7x
topology: tpu7x:2x2x1
jax: 0.10.0
libtpu: 0.0.40
codegen_flags: <defaults>
</compile_context>

<pallas_src>
import jax
import jax.numpy as jnp
from jax import lax
from jax.experimental import pallas as pl
from jax.experimental.pallas import tpu as pltpu


_DMA_DEPTH = 8  # in-flight row DMAs per table in the HBM fallback path


def _round_up(x, m):
    return ((x + m - 1) // m) * m


# --------------------------------------------------------------------------
# Path A: tables resident in VMEM, gather done with dynamic sublane slices.
# --------------------------------------------------------------------------
def _vmem_gather_kernel(uid_ref, iid_ref, u_w_ref, i_w_ref, u_out_ref, i_out_ref):
    tile_b = u_out_ref.shape[0]
    base = pl.program_id(0) * tile_b

    def row(r, carry):
        uid = uid_ref[base + r]          # scalar read from SMEM (prefetched ids)
        iid = iid_ref[base + r]
        # (1, E) VMEM load with dynamic sublane offset -> store into this tile's
        # output block.  The (TILE_B, E) block is written back to HBM in one
        # dense DMA by the pipeline.
        u_out_ref[pl.ds(r, 1), :] = u_w_ref[pl.ds(uid, 1), :]
        i_out_ref[pl.ds(r, 1), :] = i_w_ref[pl.ds(iid, 1), :]
        return carry

    lax.fori_loop(0, tile_b, row, 0, unroll=8)


# --------------------------------------------------------------------------
# Path B: tables stay in HBM; batched async row-gathers straight into the
# (TILE_B, E) output block, with a bounded window of in-flight DMAs.
# --------------------------------------------------------------------------
def _hbm_gather_kernel(uid_ref, iid_ref, u_w_hbm, i_w_hbm,
                       u_out_ref, i_out_ref, u_sem, i_sem):
    tile_b = u_out_ref.shape[0]
    base = pl.program_id(0) * tile_b

    def start(r, slot):
        uid = uid_ref[base + r]
        iid = iid_ref[base + r]
        pltpu.make_async_copy(u_w_hbm.at[pl.ds(uid, 1), :],
                              u_out_ref.at[pl.ds(r, 1), :],
                              u_sem.at[slot]).start()
        pltpu.make_async_copy(i_w_hbm.at[pl.ds(iid, 1), :],
                              i_out_ref.at[pl.ds(r, 1), :],
                              i_sem.at[slot]).start()

    def wait(slot):
        # Wait descriptors only need shape-compatible refs + the semaphore.
        pltpu.make_async_copy(u_w_hbm.at[pl.ds(0, 1), :],
                              u_out_ref.at[pl.ds(0, 1), :],
                              u_sem.at[slot]).wait()
        pltpu.make_async_copy(i_w_hbm.at[pl.ds(0, 1), :],
                              i_out_ref.at[pl.ds(0, 1), :],
                              i_sem.at[slot]).wait()

    @pl.loop(0, tile_b)
    def _(r):
        slot = r % _DMA_DEPTH

        @pl.when(r >= _DMA_DEPTH)
        def _():
            wait(slot)  # retire the copy that used this slot _DMA_DEPTH rows ago

        start(r, slot)

    # Drain the last _DMA_DEPTH copies (tile_b is always >= _DMA_DEPTH).
    @pl.loop(0, _DMA_DEPTH)
    def _(s):
        wait(s)


# --------------------------------------------------------------------------
# Wrapper: Pallas equivalent of MFEncoder.forward(user_id, item_id).
# --------------------------------------------------------------------------
def mf_encoder_forward(user_id, item_id, user_weight, item_weight, *, tile_b=256):
    B = user_id.shape[0]
    U, E = user_weight.shape
    I, _ = item_weight.shape
    itemsize = user_weight.dtype.itemsize

    user_id = user_id.astype(jnp.int32)
    item_id = item_id.astype(jnp.int32)

    # Batch tiling: TILE_B rows per grid step, multiple of 8 (sublane-dense
    # output blocks).  Pad the batch with id 0 and slice the result back.
    tile_b = max(8, min(_round_up(tile_b, 8), _round_up(B, 8)))
    b_pad = _round_up(B, tile_b)
    if b_pad != B:
        user_id = jnp.pad(user_id, (0, b_pad - B))
        item_id = jnp.pad(item_id, (0, b_pad - B))
    num_tiles = b_pad // tile_b

    out_shape = (jax.ShapeDtypeStruct((b_pad, E), user_weight.dtype),
                 jax.ShapeDtypeStruct((b_pad, E), item_weight.dtype))
    out_specs = [
        pl.BlockSpec((tile_b, E), lambda b, uid, iid: (b, 0)),
        pl.BlockSpec((tile_b, E), lambda b, uid, iid: (b, 0)),
    ]

    # VMEM budget (v7x has 64 MiB physical vs 128 MiB on v5e/v6e).
    try:
        vmem_cap = int(pltpu.get_tpu_info().vmem_capacity_bytes)
    except Exception:
        vmem_cap = 64 * 1024 * 1024  # conservative (v7x-safe) default

    table_bytes = (U * E + I * E) * itemsize
    out_buf_bytes = 2 * 2 * tile_b * E * itemsize  # 2 outputs x double buffer
    resident = (table_bytes + out_buf_bytes + (2 << 20)) <= int(vmem_cap * 0.75)

    cost = pl.CostEstimate(
        flops=0,
        transcendentals=0,
        bytes_accessed=int(4 * b_pad * E * itemsize + table_bytes),
    )

    if resident:
        # Whole tables live in VMEM; constant index_map -> loaded once.
        grid_spec = pltpu.PrefetchScalarGridSpec(
            num_scalar_prefetch=2,                    # user_id, item_id -> SMEM
            grid=(num_tiles,),
            in_specs=[
                pl.BlockSpec((U, E), lambda b, uid, iid: (0, 0)),
                pl.BlockSpec((I, E), lambda b, uid, iid: (0, 0)),
            ],
            out_specs=out_specs,
        )
        kernel = _vmem_gather_kernel
        needed = table_bytes + out_buf_bytes
    else:
        # Tables stay in HBM; manual windowed row DMAs inside the kernel.
        grid_spec = pltpu.PrefetchScalarGridSpec(
            num_scalar_prefetch=2,
            grid=(num_tiles,),
            in_specs=[
                pl.BlockSpec(memory_space=pl.ANY),
                pl.BlockSpec(memory_space=pl.ANY),
            ],
            out_specs=out_specs,
            scratch_shapes=[
                pltpu.SemaphoreType.DMA((_DMA_DEPTH,)),
                pltpu.SemaphoreType.DMA((_DMA_DEPTH,)),
            ],
        )
        kernel = _hbm_gather_kernel
        needed = out_buf_bytes

    vmem_limit = int(min(vmem_cap, max(needed + (4 << 20), 32 << 20)))

    # NOTE: for tiny batches the native XLA gather (jnp.take) can beat any
    # custom kernel on launch overhead alone; callers may dispatch on B.
    u_out, i_out = pl.pallas_call(
        kernel,
        out_shape=out_shape,
        grid_spec=grid_spec,
        compiler_params=pltpu.CompilerParams(
            dimension_semantics=("parallel",),   # disjoint output tiles -> megacore OK
            vmem_limit_bytes=vmem_limit),
        cost_estimate=cost,
    )(user_id, item_id, user_weight, item_weight)

    return u_out[:B], i_out[:B]


if __name__ == "__main__":
    # Deterministic synthetic parameters (nn.Embedding default init ~ N(0, 1)).
    user_num, item_num, emb_size, batch = 64, 96, 128, 8

    key = jax.random.PRNGKey(0)
    ku, ki, kuid, kiid = jax.random.split(key, 4)
    user_weight = jax.random.normal(ku, (user_num, emb_size), dtype=jnp.float32)
    item_weight = jax.random.normal(ki, (item_num, emb_size), dtype=jnp.float32)
    user_id = jax.random.randint(kuid, (batch,), 0, user_num, dtype=jnp.int32)
    item_id = jax.random.randint(kiid, (batch,), 0, item_num, dtype=jnp.int32)

    u_emb, i_emb = mf_encoder_forward(user_id, item_id, user_weight, item_weight)
    jax.block_until_ready((u_emb, i_emb))

    # Correctness check vs. plain-JAX gather (== torch embedding lookup).
    assert u_emb.shape == (batch, emb_size) and i_emb.shape == (batch, emb_size)
    assert jnp.array_equal(u_emb, user_weight[user_id])
    assert jnp.array_equal(i_emb, item_weight[item_id])

    # Also exercise a larger, non-multiple-of-tile batch (padding + multi-tile grid).
    big_batch = 300
    kb1, kb2 = jax.random.split(jax.random.PRNGKey(1))
    uid2 = jax.random.randint(kb1, (big_batch,), 0, user_num, dtype=jnp.int32)
    iid2 = jax.random.randint(kb2, (big_batch,), 0, item_num, dtype=jnp.int32)
    u2, i2 = mf_encoder_forward(uid2, iid2, user_weight, item_weight, tile_b=128)
    jax.block_until_ready((u2, i2))
    assert jnp.array_equal(u2, user_weight[uid2])
    assert jnp.array_equal(i2, item_weight[iid2])

    print("KERNEL_OK")
</pallas_src>

<mosaic_0001>
module attributes {stable_mosaic.version = 11 : i64} {
  func.func @_vmem_gather_kernel(%arg0: i32, %arg1: memref<8xi32, #tpu.memory_space<smem>>, %arg2: memref<8xi32, #tpu.memory_space<smem>>, %arg3: memref<64x128xf32, #tpu.memory_space<vmem>>, %arg4: memref<96x128xf32, #tpu.memory_space<vmem>>, %arg5: memref<8x128xf32, #tpu.memory_space<vmem>>, %arg6: memref<8x128xf32, #tpu.memory_space<vmem>>) attributes {dimension_semantics = [#tpu.dimension_semantics<parallel>], iteration_bounds = array<i64: 1>, scalar_prefetch = 2 : i64, scratch_operands = 0 : i64, tpu.core_type = #tpu.core_type<tc>, window_params = [{pipeline_mode = #tpu.pipeline_mode<synchronous>, transform_indices = @transform_0, window_bounds = array<i64: 64, 128>}, {pipeline_mode = #tpu.pipeline_mode<synchronous>, transform_indices = @transform_1, window_bounds = array<i64: 96, 128>}, {transform_indices = @transform_2, window_bounds = array<i64: 8, 128>}, {transform_indices = @transform_3, window_bounds = array<i64: 8, 128>}]} {
    %c8_i32 = arith.constant 8 : i32
    %0 = arith.muli %arg0, %c8_i32 : i32
    %c0_i32 = arith.constant 0 : i32
    %1 = arith.addi %0, %c0_i32 : i32
    %2 = arith.index_cast %1 : i32 to index
    %3 = memref.load %arg1[%2] : memref<8xi32, #tpu.memory_space<smem>>
    %4 = arith.addi %0, %c0_i32 : i32
    %5 = arith.index_cast %4 : i32 to index
    %6 = memref.load %arg2[%5] : memref<8xi32, #tpu.memory_space<smem>>
    %7 = arith.index_cast %3 : i32 to index
    %c0 = arith.constant 0 : index
    %8 = vector.load %arg3[%7, %c0] : memref<64x128xf32, #tpu.memory_space<vmem>>, vector<1x128xf32>
    %9 = arith.index_cast %c0_i32 : i32 to index
    %c0_0 = arith.constant 0 : index
    %10 = vector.load %arg5[%9, %c0_0] : memref<8x128xf32, #tpu.memory_space<vmem>>, vector<1x128xf32>
    tpu.vector_store %arg5[%9, %c0_0], %8 {strides = array<i32>} : memref<8x128xf32, #tpu.memory_space<vmem>>, vector<1x128xf32>,
    %11 = arith.index_cast %6 : i32 to index
    %c0_1 = arith.constant 0 : index
    %12 = vector.load %arg4[%11, %c0_1] : memref<96x128xf32, #tpu.memory_space<vmem>>, vector<1x128xf32>
    %13 = arith.index_cast %c0_i32 : i32 to index
    %c0_2 = arith.constant 0 : index
    %14 = vector.load %arg6[%13, %c0_2] : memref<8x128xf32, #tpu.memory_space<vmem>>, vector<1x128xf32>
    tpu.vector_store %arg6[%13, %c0_2], %12 {strides = array<i32>} : memref<8x128xf32, #tpu.memory_space<vmem>>, vector<1x128xf32>,
    %c1_i32 = arith.constant 1 : i32
    %15 = arith.addi %0, %c1_i32 : i32
    %16 = arith.index_cast %15 : i32 to index
    %17 = memref.load %arg1[%16] : memref<8xi32, #tpu.memory_space<smem>>
    %18 = arith.addi %0, %c1_i32 : i32
    %19 = arith.index_cast %18 : i32 to index
    %20 = memref.load %arg2[%19] : memref<8xi32, #tpu.memory_space<smem>>
    %21 = arith.index_cast %17 : i32 to index
    %c0_3 = arith.constant 0 : index
    %22 = vector.load %arg3[%21, %c0_3] : memref<64x128xf32, #tpu.memory_space<vmem>>, vector<1x128xf32>
    %23 = arith.index_cast %c1_i32 : i32 to index
    %c0_4 = arith.constant 0 : index
    %24 = vector.load %arg5[%23, %c0_4] : memref<8x128xf32, #tpu.memory_space<vmem>>, vector<1x128xf32>
    tpu.vector_store %arg5[%23, %c0_4], %22 {strides = array<i32>} : memref<8x128xf32, #tpu.memory_space<vmem>>, vector<1x128xf32>,
    %25 = arith.index_cast %20 : i32 to index
    %c0_5 = arith.constant 0 : index
    %26 = vector.load %arg4[%25, %c0_5] : memref<96x128xf32, #tpu.memory_space<vmem>>, vector<1x128xf32>
    %27 = arith.index_cast %c1_i32 : i32 to index
    %c0_6 = arith.constant 0 : index
    %28 = vector.load %arg6[%27, %c0_6] : memref<8x128xf32, #tpu.memory_space<vmem>>, vector<1x128xf32>
    tpu.vector_store %arg6[%27, %c0_6], %26 {strides = array<i32>} : memref<8x128xf32, #tpu.memory_space<vmem>>, vector<1x128xf32>,
    %c2_i32 = arith.constant 2 : i32
    %29 = arith.addi %0, %c2_i32 : i32
    %30 = arith.index_cast %29 : i32 to index
    %31 = memref.load %arg1[%30] : memref<8xi32, #tpu.memory_space<smem>>
    %32 = arith.addi %0, %c2_i32 : i32
    %33 = arith.index_cast %32 : i32 to index
    %34 = memref.load %arg2[%33] : memref<8xi32, #tpu.memory_space<smem>>
    %35 = arith.index_cast %31 : i32 to index
    %c0_7 = arith.constant 0 : index
    %36 = vector.load %arg3[%35, %c0_7] : memref<64x128xf32, #tpu.memory_space<vmem>>, vector<1x128xf32>
    %37 = arith.index_cast %c2_i32 : i32 to index
    %c0_8 = arith.constant 0 : index
    %38 = vector.load %arg5[%37, %c0_8] : memref<8x128xf32, #tpu.memory_space<vmem>>, vector<1x128xf32>
    tpu.vector_store %arg5[%37, %c0_8], %36 {strides = array<i32>} : memref<8x128xf32, #tpu.memory_space<vmem>>, vector<1x128xf32>,
    %39 = arith.index_cast %34 : i32 to index
    %c0_9 = arith.constant 0 : index
    %40 = vector.load %arg4[%39, %c0_9] : memref<96x128xf32, #tpu.memory_space<vmem>>, vector<1x128xf32>
    %41 = arith.index_cast %c2_i32 : i32 to index
    %c0_10 = arith.constant 0 : index
    %42 = vector.load %arg6[%41, %c0_10] : memref<8x128xf32, #tpu.memory_space<vmem>>, vector<1x128xf32>
    tpu.vector_store %arg6[%41, %c0_10], %40 {strides = array<i32>} : memref<8x128xf32, #tpu.memory_space<vmem>>, vector<1x128xf32>,
    %c3_i32 = arith.constant 3 : i32
    %43 = arith.addi %0, %c3_i32 : i32
    %44 = arith.index_cast %43 : i32 to index
    %45 = memref.load %arg1[%44] : memref<8xi32, #tpu.memory_space<smem>>
    %46 = arith.addi %0, %c3_i32 : i32
    %47 = arith.index_cast %46 : i32 to index
    %48 = memref.load %arg2[%47] : memref<8xi32, #tpu.memory_space<smem>>
    %49 = arith.index_cast %45 : i32 to index
    %c0_11 = arith.constant 0 : index
    %50 = vector.load %arg3[%49, %c0_11] : memref<64x128xf32, #tpu.memory_space<vmem>>, vector<1x128xf32>
    %51 = arith.index_cast %c3_i32 : i32 to index
    %c0_12 = arith.constant 0 : index
    %52 = vector.load %arg5[%51, %c0_12] : memref<8x128xf32, #tpu.memory_space<vmem>>, vector<1x128xf32>
    tpu.vector_store %arg5[%51, %c0_12], %50 {strides = array<i32>} : memref<8x128xf32, #tpu.memory_space<vmem>>, vector<1x128xf32>,
    %53 = arith.index_cast %48 : i32 to index
    %c0_13 = arith.constant 0 : index
    %54 = vector.load %arg4[%53, %c0_13] : memref<96x128xf32, #tpu.memory_space<vmem>>, vector<1x128xf32>
    %55 = arith.index_cast %c3_i32 : i32 to index
    %c0_14 = arith.constant 0 : index
    %56 = vector.load %arg6[%55, %c0_14] : memref<8x128xf32, #tpu.memory_space<vmem>>, vector<1x128xf32>
    tpu.vector_store %arg6[%55, %c0_14], %54 {strides = array<i32>} : memref<8x128xf32, #tpu.memory_space<vmem>>, vector<1x128xf32>,
    %c4_i32 = arith.constant 4 : i32
    %57 = arith.addi %0, %c4_i32 : i32
    %58 = arith.index_cast %57 : i32 to index
    %59 = memref.load %arg1[%58] : memref<8xi32, #tpu.memory_space<smem>>
    %60 = arith.addi %0, %c4_i32 : i32
    %61 = arith.index_cast %60 : i32 to index
    %62 = memref.load %arg2[%61] : memref<8xi32, #tpu.memory_space<smem>>
    %63 = arith.index_cast %59 : i32 to index
    %c0_15 = arith.constant 0 : index
    %64 = vector.load %arg3[%63, %c0_15] : memref<64x128xf32, #tpu.memory_space<vmem>>, vector<1x128xf32>
    %65 = arith.index_cast %c4_i32 : i32 to index
    %c0_16 = arith.constant 0 : index
    %66 = vector.load %arg5[%65, %c0_16] : memref<8x128xf32, #tpu.memory_space<vmem>>, vector<1x128xf32>
    tpu.vector_store %arg5[%65, %c0_16], %64 {strides = array<i32>} : memref<8x128xf32, #tpu.memory_space<vmem>>, vector<1x128xf32>,
    %67 = arith.index_cast %62 : i32 to index
    %c0_17 = arith.constant 0 : index
    %68 = vector.load %arg4[%67, %c0_17] : memref<96x128xf32, #tpu.memory_space<vmem>>, vector<1x128xf32>
    %69 = arith.index_cast %c4_i32 : i32 to index
    %c0_18 = arith.constant 0 : index
    %70 = vector.load %arg6[%69, %c0_18] : memref<8x128xf32, #tpu.memory_space<vmem>>, vector<1x128xf32>
    tpu.vector_store %arg6[%69, %c0_18], %68 {strides = array<i32>} : memref<8x128xf32, #tpu.memory_space<vmem>>, vector<1x128xf32>,
    %c5_i32 = arith.constant 5 : i32
    %71 = arith.addi %0, %c5_i32 : i32
    %72 = arith.index_cast %71 : i32 to index
    %73 = memref.load %arg1[%72] : memref<8xi32, #tpu.memory_space<smem>>
    %74 = arith.addi %0, %c5_i32 : i32
    %75 = arith.index_cast %74 : i32 to index
    %76 = memref.load %arg2[%75] : memref<8xi32, #tpu.memory_space<smem>>
    %77 = arith.index_cast %73 : i32 to index
    %c0_19 = arith.constant 0 : index
    %78 = vector.load %arg3[%77, %c0_19] : memref<64x128xf32, #tpu.memory_space<vmem>>, vector<1x128xf32>
    %79 = arith.index_cast %c5_i32 : i32 to index
    %c0_20 = arith.constant 0 : index
    %80 = vector.load %arg5[%79, %c0_20] : memref<8x128xf32, #tpu.memory_space<vmem>>, vector<1x128xf32>
    tpu.vector_store %arg5[%79, %c0_20], %78 {strides = array<i32>} : memref<8x128xf32, #tpu.memory_space<vmem>>, vector<1x128xf32>,
    %81 = arith.index_cast %76 : i32 to index
    %c0_21 = arith.constant 0 : index
    %82 = vector.load %arg4[%81, %c0_21] : memref<96x128xf32, #tpu.memory_space<vmem>>, vector<1x128xf32>
    %83 = arith.index_cast %c5_i32 : i32 to index
    %c0_22 = arith.constant 0 : index
    %84 = vector.load %arg6[%83, %c0_22] : memref<8x128xf32, #tpu.memory_space<vmem>>, vector<1x128xf32>
    tpu.vector_store %arg6[%83, %c0_22], %82 {strides = array<i32>} : memref<8x128xf32, #tpu.memory_space<vmem>>, vector<1x128xf32>,
    %c6_i32 = arith.constant 6 : i32
    %85 = arith.addi %0, %c6_i32 : i32
    %86 = arith.index_cast %85 : i32 to index
    %87 = memref.load %arg1[%86] : memref<8xi32, #tpu.memory_space<smem>>
    %88 = arith.addi %0, %c6_i32 : i32
    %89 = arith.index_cast %88 : i32 to index
    %90 = memref.load %arg2[%89] : memref<8xi32, #tpu.memory_space<smem>>
    %91 = arith.index_cast %87 : i32 to index
    %c0_23 = arith.constant 0 : index
    %92 = vector.load %arg3[%91, %c0_23] : memref<64x128xf32, #tpu.memory_space<vmem>>, vector<1x128xf32>
    %93 = arith.index_cast %c6_i32 : i32 to index
    %c0_24 = arith.constant 0 : index
    %94 = vector.load %arg5[%93, %c0_24] : memref<8x128xf32, #tpu.memory_space<vmem>>, vector<1x128xf32>
    tpu.vector_store %arg5[%93, %c0_24], %92 {strides = array<i32>} : memref<8x128xf32, #tpu.memory_space<vmem>>, vector<1x128xf32>,
    %95 = arith.index_cast %90 : i32 to index
    %c0_25 = arith.constant 0 : index
    %96 = vector.load %arg4[%95, %c0_25] : memref<96x128xf32, #tpu.memory_space<vmem>>, vector<1x128xf32>
    %97 = arith.index_cast %c6_i32 : i32 to index
    %c0_26 = arith.constant 0 : index
    %98 = vector.load %arg6[%97, %c0_26] : memref<8x128xf32, #tpu.memory_space<vmem>>, vector<1x128xf32>
    tpu.vector_store %arg6[%97, %c0_26], %96 {strides = array<i32>} : memref<8x128xf32, #tpu.memory_space<vmem>>, vector<1x128xf32>,
    %c7_i32 = arith.constant 7 : i32
    %99 = arith.addi %0, %c7_i32 : i32
    %100 = arith.index_cast %99 : i32 to index
    %101 = memref.load %arg1[%100] : memref<8xi32, #tpu.memory_space<smem>>
    %102 = arith.addi %0, %c7_i32 : i32
    %103 = arith.index_cast %102 : i32 to index
    %104 = memref.load %arg2[%103] : memref<8xi32, #tpu.memory_space<smem>>
    %105 = arith.index_cast %101 : i32 to index
    %c0_27 = arith.constant 0 : index
    %106 = vector.load %arg3[%105, %c0_27] : memref<64x128xf32, #tpu.memory_space<vmem>>, vector<1x128xf32>
    %107 = arith.index_cast %c7_i32 : i32 to index
    %c0_28 = arith.constant 0 : index
    %108 = vector.load %arg5[%107, %c0_28] : memref<8x128xf32, #tpu.memory_space<vmem>>, vector<1x128xf32>
    tpu.vector_store %arg5[%107, %c0_28], %106 {strides = array<i32>} : memref<8x128xf32, #tpu.memory_space<vmem>>, vector<1x128xf32>,
    %109 = arith.index_cast %104 : i32 to index
    %c0_29 = arith.constant 0 : index
    %110 = vector.load %arg4[%109, %c0_29] : memref<96x128xf32, #tpu.memory_space<vmem>>, vector<1x128xf32>
    %111 = arith.index_cast %c7_i32 : i32 to index
    %c0_30 = arith.constant 0 : index
    %112 = vector.load %arg6[%111, %c0_30] : memref<8x128xf32, #tpu.memory_space<vmem>>, vector<1x128xf32>
    tpu.vector_store %arg6[%111, %c0_30], %110 {strides = array<i32>} : memref<8x128xf32, #tpu.memory_space<vmem>>, vector<1x128xf32>,
    %c8_i32_31 = arith.constant 8 : i32
    return
  }
  func.func @transform_0(%arg0: i32, %arg1: memref<8xi32, #tpu.memory_space<smem>>, %arg2: memref<8xi32, #tpu.memory_space<smem>>) -> (i32, i32) {
    %c0_i32 = arith.constant 0 : i32
    %c0_i32_0 = arith.constant 0 : i32
    %c0_i32_1 = arith.constant 0 : i32
    return %c0_i32, %c0_i32_0 : i32, i32
  }
  func.func @transform_1(%arg0: i32, %arg1: memref<8xi32, #tpu.memory_space<smem>>, %arg2: memref<8xi32, #tpu.memory_space<smem>>) -> (i32, i32) {
    %c0_i32 = arith.constant 0 : i32
    %c0_i32_0 = arith.constant 0 : i32
    %c0_i32_1 = arith.constant 0 : i32
    return %c0_i32, %c0_i32_0 : i32, i32
  }
  func.func @transform_2(%arg0: i32, %arg1: memref<8xi32, #tpu.memory_space<smem>>, %arg2: memref<8xi32, #tpu.memory_space<smem>>) -> (i32, i32) {
    %c0_i32 = arith.constant 0 : i32
    %c0_i32_0 = arith.constant 0 : i32
    return %arg0, %c0_i32 : i32, i32
  }
  func.func @transform_3(%arg0: i32, %arg1: memref<8xi32, #tpu.memory_space<smem>>, %arg2: memref<8xi32, #tpu.memory_space<smem>>) -> (i32, i32) {
    %c0_i32 = arith.constant 0 : i32
    %c0_i32_0 = arith.constant 0 : i32
    return %arg0, %c0_i32 : i32, i32
  }
}

</mosaic_0001>

<llo_original>
// kernel: tpu_custom_call.1
$region0: #{tpu_custom_call.1}
  #allocation0 [shape = 'u32[]', space=smem, size = 0x4, offset = 0x4, fixed_abs, tag = 'smem constant byte address 0x4 - core index']
  #allocation1 [shape = 'u32[144,128]{1,0:T(1,128)}', space=vmem, size = 0x12000, scoped, tag = 'internal scratch']
  #allocation2 [shape = 's32[1]{0}', space=sflag, size = 0x4, scoped, tag = 'scoped memory for tpu_custom_call.1']
  #allocation3 [shape = 'u8[512]{0}', space=smem, size = 0x200, scoped, tag = 'prefetched SMEM operand 0']
  #allocation4 [shape = 'u8[512]{0}', space=smem, size = 0x200, scoped, tag = 'prefetched SMEM operand 1']
  %s0 = inlined_call_operand.hbm [shape: s32[8], index: 0, kind: input, shape index: {}]
  %s1 = inlined_call_operand.vmem [shape: s32[8], index: 1, kind: input, shape index: {}]
  %s2 = inlined_call_operand.hbm [shape: f32[64,128], index: 2, kind: input, shape index: {}]
  %s3 = inlined_call_operand.hbm [shape: f32[96,128], index: 3, kind: input, shape index: {}]
  %s4 = inlined_call_operand.hbm [shape: f32[8,128], index: 4, kind: output, shape index: {0}]
  %s5 = inlined_call_operand.hbm [shape: f32[8,128], index: 5, kind: output, shape index: {1}]
  %6 = xla_tuple %s4, %s5
  %s7 = sld [smem:[#allocation0]]
  $region34: #{tpu_custom_call.1} parent=0
    _
  %s9 = ssub.s32 1, %s7
  %s10 = scalar_select 0, %s9, %s7
  %12 = dma.hbm_to_smem %s0, 16, [#allocation3], [#allocation2]
  %s13 = sshll.u32 %s1, 4
  %s14 = int_to_ptr.vmem [resolvable:$true] %s13
  %16 = dma.vmem_to_smem %s14, 16, [#allocation4], [#allocation2]
  %17 = dma.done [#allocation2], 32
  %18 = sfence
  $region1: #{tpu_custom_call.1} parent=0
    #allocation5 [shape = 'u8[32768]{0}', space=vmem, size = 0x8000, scoped, tag = 'input window, operand 2, single buffered']
    #allocation6 [shape = 's32[1]{0}', space=sflag, size = 0x4, scoped, tag = 'scoped memory for tpu_custom_call.1']
    #allocation7 [shape = 's32[1]{0}', space=sflag, size = 0x4, scoped, tag = 'scoped memory for tpu_custom_call.1']
    #allocation8 [shape = 'u8[49152]{0}', space=vmem, size = 0xc000, scoped, tag = 'input window, operand 3, single buffered']
    #allocation9 [shape = 's32[1]{0}', space=sflag, size = 0x4, scoped, tag = 'scoped memory for tpu_custom_call.1']
    #allocation10 [shape = 'u8[4096]{0}', space=vmem, size = 0x1000, scoped, tag = 'output window, operand 0, single buffered']
    #allocation11 [shape = 'u8[4096]{0}', space=vmem, size = 0x1000, scoped, tag = 'output window, operand 1, single buffered']
    #allocation12 [shape = 's32[1]{0}', space=sflag, size = 0x4, scoped, tag = 'scoped memory for tpu_custom_call.1']
    %19 = vsyncpa [#allocation6], 0
    %20 = vsyncpa [#allocation9], 0
    %21 = vsyncpa [#allocation7], 0
    %22 = vsyncpa [#allocation12], 0
    // Predicated region
    $region2: #{tpu_custom_call.1} parent=1 // pred_check
      _
    $region3: #{tpu_custom_call.1} parent=1 // pred_check_branch
      %24 = sbr.rel (0) target = $region5
    $region4: #{tpu_custom_call.1} parent=1 // pred_region
      %s26 = ssub.s32 1024, 1024
      %27 = vsyncadd [#allocation6], %s26
      %s28 = sshll.u32 [#allocation5], 4
      %s29 = int_to_ptr.vmem [resolvable:$true] %s28
      %34 = dma.hbm_to_vmem [thread:$0]  %s2, 1024, %s29, [#allocation6], 128, 128, 8
    $region5: #{tpu_custom_call.1} parent=1 // pred_fallthru
      _
    // Predicated region
    $region6: #{tpu_custom_call.1} parent=1 // pred_check
      _
    $region7: #{tpu_custom_call.1} parent=1 // pred_check_branch
      %36 = sbr.rel (0) target = $region9
    $region8: #{tpu_custom_call.1} parent=1 // pred_region
      %s38 = ssub.s32 1536, 1536
      %39 = vsyncadd [#allocation9], %s38
      %s40 = sshll.u32 [#allocation8], 4
      %s41 = int_to_ptr.vmem [resolvable:$true] %s40
      %46 = dma.hbm_to_vmem [thread:$0]  %s3, 1536, %s41, [#allocation9], 128, 128, 8
    $region9: #{tpu_custom_call.1} parent=1 // pred_fallthru
      _
    // Predicated region
    $region10: #{tpu_custom_call.1} parent=1 // pred_check
      _
    $region11: #{tpu_custom_call.1} parent=1 // pred_check_branch
      %48 = sbr.rel (0) target = $region13
    $region12: #{tpu_custom_call.1} parent=1 // pred_region
      %49 = dma.done [#allocation6], 1024
    $region13: #{tpu_custom_call.1} parent=1 // pred_fallthru
      _
    // Predicated region
    $region14: #{tpu_custom_call.1} parent=1 // pred_check
      _
    $region15: #{tpu_custom_call.1} parent=1 // pred_check_branch
      %51 = sbr.rel (0) target = $region17
    $region16: #{tpu_custom_call.1} parent=1 // pred_region
      %52 = dma.done [#allocation9], 1536
    $region17: #{tpu_custom_call.1} parent=1 // pred_fallthru
      _
    %s53 = smul.u32 0, 8
    %s54 = sld [smem:[#allocation3 + %s53]]
    %s55 = sld [smem:[#allocation4 + %s53]]
    %s56 = scalar_lea.vmem [#allocation5], %s54
    %v57 = vld [vmem:[%s56] sm:$0x1]
    %58 = vst [vmem:[#allocation10] sm:$0x1] %v57
    %s59 = scalar_lea.vmem [#allocation8], %s55
    %v60 = vld [vmem:[%s59] sm:$0x1]
    %61 = vst [vmem:[#allocation11] sm:$0x1] %v60
    %s62 = sadd.s32 %s53, 1
    %s63 = sld [smem:[#allocation3 + %s62]]
    %s64 = sld [smem:[#allocation4 + %s62]]
    %s65 = scalar_lea.vmem [#allocation5], %s63
    %v66 = vld [vmem:[%s65] sm:$0x1]
    %67 = vst [vmem:[#allocation10 + $0x1] sm:$0x1] %v66
    %s68 = scalar_lea.vmem [#allocation8], %s64
    %v69 = vld [vmem:[%s68] sm:$0x1]
    %70 = vst [vmem:[#allocation11 + $0x1] sm:$0x1] %v69
    %s71 = sadd.s32 %s53, 2
    %s72 = sld [smem:[#allocation3 + %s71]]
    %s73 = sld [smem:[#allocation4 + %s71]]
    %s74 = scalar_lea.vmem [#allocation5], %s72
    %v75 = vld [vmem:[%s74] sm:$0x1]
    %76 = vst [vmem:[#allocation10 + $0x2] sm:$0x1] %v75
    %s77 = scalar_lea.vmem [#allocation8], %s73
    %v78 = vld [vmem:[%s77] sm:$0x1]
    %79 = vst [vmem:[#allocation11 + $0x2] sm:$0x1] %v78
    %s80 = sadd.s32 %s53, 3
    %s81 = sld [smem:[#allocation3 + %s80]]
    %s82 = sld [smem:[#allocation4 + %s80]]
    %s83 = scalar_lea.vmem [#allocation5], %s81
    %v84 = vld [vmem:[%s83] sm:$0x1]
    %85 = vst [vmem:[#allocation10 + $0x3] sm:$0x1] %v84
    %s86 = scalar_lea.vmem [#allocation8], %s82
    %v87 = vld [vmem:[%s86] sm:$0x1]
    %88 = vst [vmem:[#allocation11 + $0x3] sm:$0x1] %v87
    %s89 = sadd.s32 %s53, 4
    %s90 = sld [smem:[#allocation3 + %s89]]
    %s91 = sld [smem:[#allocation4 + %s89]]
    %s92 = scalar_lea.vmem [#allocation5], %s90
    %v93 = vld [vmem:[%s92] sm:$0x1]
    %94 = vst [vmem:[#allocation10 + $0x4] sm:$0x1] %v93
    %s95 = scalar_lea.vmem [#allocation8], %s91
    %v96 = vld [vmem:[%s95] sm:$0x1]
    %97 = vst [vmem:[#allocation11 + $0x4] sm:$0x1] %v96
    %s98 = sadd.s32 %s53, 5
    %s99 = sld [smem:[#allocation3 + %s98]]
    %s100 = sld [smem:[#allocation4 + %s98]]
    %s101 = scalar_lea.vmem [#allocation5], %s99
    %v102 = vld [vmem:[%s101] sm:$0x1]
    %103 = vst [vmem:[#allocation10 + $0x5] sm:$0x1] %v102
    %s104 = scalar_lea.vmem [#allocation8], %s100
    %v105 = vld [vmem:[%s104] sm:$0x1]
    %106 = vst [vmem:[#allocation11 + $0x5] sm:$0x1] %v105
    %s107 = sadd.s32 %s53, 6
    %s108 = sld [smem:[#allocation3 + %s107]]
    %s109 = sld [smem:[#allocation4 + %s107]]
    %s110 = scalar_lea.vmem [#allocation5], %s108
    %v111 = vld [vmem:[%s110] sm:$0x1]
    %112 = vst [vmem:[#allocation10 + $0x6] sm:$0x1] %v111
    %s113 = scalar_lea.vmem [#allocation8], %s109
    %v114 = vld [vmem:[%s113] sm:$0x1]
    %115 = vst [vmem:[#allocation11 + $0x6] sm:$0x1] %v114
    %s116 = sadd.s32 %s53, 7
    %s117 = sld [smem:[#allocation3 + %s116]]
    %s118 = sld [smem:[#allocation4 + %s116]]
    %s119 = scalar_lea.vmem [#allocation5], %s117
    %v120 = vld [vmem:[%s119] sm:$0x1]
    %121 = vst [vmem:[#allocation10 + $0x7] sm:$0x1] %v120
    %s122 = scalar_lea.vmem [#allocation8], %s118
    %v123 = vld [vmem:[%s122] sm:$0x1]
    %124 = vst [vmem:[#allocation11 + $0x7] sm:$0x1] %v123
    // Predicated region
    $region18: #{tpu_custom_call.1} parent=1 // pred_check
      _
    $region19: #{tpu_custom_call.1} parent=1 // pred_check_branch
      %126 = sbr.rel (0) target = $region21
    $region20: #{tpu_custom_call.1} parent=1 // pred_region
      %s128 = ssub.s32 128, 128
      %129 = vsyncadd [#allocation7], %s128
      %s131 = sshll.u32 [#allocation10], 4
      %s132 = int_to_ptr.vmem [resolvable:$true] %s131
      %134 = dma.vmem_to_hbm [thread:$0]  %s132, 128, %s4, [#allocation7]
    $region21: #{tpu_custom_call.1} parent=1 // pred_fallthru
      _
    // Predicated region
    $region22: #{tpu_custom_call.1} parent=1 // pred_check
      _
    $region23: #{tpu_custom_call.1} parent=1 // pred_check_branch
      %136 = sbr.rel (0) target = $region25
    $region24: #{tpu_custom_call.1} parent=1 // pred_region
      %s138 = ssub.s32 128, 128
      %139 = vsyncadd [#allocation12], %s138
      %s141 = sshll.u32 [#allocation11], 4
      %s142 = int_to_ptr.vmem [resolvable:$true] %s141
      %144 = dma.vmem_to_hbm [thread:$0]  %s142, 128, %s5, [#allocation12]
    $region25: #{tpu_custom_call.1} parent=1 // pred_fallthru
      _
    // Predicated region
    $region26: #{tpu_custom_call.1} parent=1 // pred_check
      _
    $region27: #{tpu_custom_call.1} parent=1 // pred_check_branch
      %146 = sbr.rel (0) target = $region29
    $region28: #{tpu_custom_call.1} parent=1 // pred_region
      %147 = dma.done [#allocation7], 128
    $region29: #{tpu_custom_call.1} parent=1 // pred_fallthru
      _
    // Predicated region
    $region30: #{tpu_custom_call.1} parent=1 // pred_check
      _
    $region31: #{tpu_custom_call.1} parent=1 // pred_check_branch
      %149 = sbr.rel (0) target = $region33
    $region32: #{tpu_custom_call.1} parent=1 // pred_region
      %150 = dma.done [#allocation12], 128
    $region33: #{tpu_custom_call.1} parent=1 // pred_fallthru
      _
    %151 = vsyncpa [#allocation6], 1
    %152 = vsyncpa [#allocation9], 1
    %153 = vsyncpa [#allocation7], 1
    %154 = vsyncpa [#allocation12], 1

</llo_original>
